<compile_context>
chip_gen: v7x
topology: tpu7x:2x2x1
jax: 0.10.0
libtpu: 0.0.40
codegen_flags: <defaults>
</compile_context>

<pallas_src>
import jax
import jax.numpy as jnp
from jax.experimental import pallas as pl
from jax.experimental.pallas import tpu as pltpu

NUM_MASKS = 2
FREQ_MASK_PARAM = 15
TIME_MASK_PARAM = 35


def _specaugment_kernel(mask_ref, x_ref, o_ref):
    """Tile body: one broadcasted select against the precomputed mask row.

    mask_ref: VMEM int32 (1, COL_TILE)  -- nonzero where the element is masked.
    x_ref/o_ref: VMEM (ROW_TILE, COL_TILE), lane-dense (last dim = F*T chunk).
    """
    zero = jnp.zeros((), dtype=o_ref.dtype)
    o_ref[...] = jnp.where(mask_ref[...] != 0, zero, x_ref[...])


def _sample_mask_bounds(key, mask_param, axis_size):
    """torchaudio.functional.mask_along_axis sampling (p=1.0, iid_masks=False).

    With p == 1.0 torchaudio does NOT clamp mask_param to the axis length, and
    mask_end = trunc(min_value) + trunc(value); both are reproduced here
    (float->int32 astype truncates toward zero, same as torch .long()).
    """
    k1, k2 = jax.random.split(key)
    value = jax.random.uniform(k1, (), dtype=jnp.float32) * mask_param
    min_value = jax.random.uniform(k2, (), dtype=jnp.float32) * (axis_size - value)
    start = min_value.astype(jnp.int32)
    end = start + value.astype(jnp.int32)
    return start, end


def _round_up(x, m):
    return ((x + m - 1) // m) * m


def _chip_settings():
    """Returns (max_block_bytes, vmem_limit_bytes, want_two_parallel_steps)."""
    vmem_cap = 128 << 20
    try:
        info = pltpu.get_tpu_info()
        vmem_cap = int(getattr(info, "vmem_capacity_bytes", vmem_cap))
    except Exception:
        pass
    if vmem_cap <= (64 << 20):
        # v7x-like: 64 MiB/TC VMEM, 2 TensorCores, ~3.2 TB/s HBM. Larger blocks
        # amortize the ~0.35 us/step overhead; keep >=2 parallel grid steps so
        # "parallel" semantics can shard across both cores.
        return 8 << 20, 44 << 20, True
    # v5e / v6e: 1 TensorCore, 128 MiB physical VMEM. Raise the scoped-VMEM
    # limit well above v5e's 16 MiB default so 4 MiB double-buffered in+out
    # blocks fit with headroom.
    return 4 << 20, 48 << 20, False


def _choose_row_tile(bc, row_bytes, itemsize, max_block_bytes, want_two_steps):
    """Sublane-dense row tile: a multiple of the sublane packing (8 for f32,
    16 for bf16, 32 for i8) or the full B*C extent, bounded by the per-block
    VMEM budget. Any B*C is handled via cdiv + a ragged last block."""
    sublane = max(8, 32 // itemsize)
    budget = max(1, max_block_bytes // max(row_bytes, 1))
    budget_rows = max(sublane, (budget // sublane) * sublane)
    tile = min(budget_rows, _round_up(bc, sublane))
    if want_two_steps:
        half = _round_up(pl.cdiv(bc, 2), sublane)
        if half < tile:
            tile = half
    if tile >= bc:
        tile = bc  # block == full dim: always layout-legal, no padding
    return tile


def spec_augment(x, key):
    B, C, F, T = x.shape
    BC, FT = B * C, F * T
    itemsize = jnp.dtype(x.dtype).itemsize

    # ---- scalar glue (plain JAX): sample the bands and build the shared
    # (iid_masks=False) mask row once; the kernel never recomputes it. ----
    f_ids = jnp.arange(F, dtype=jnp.int32)[:, None]   # (F, 1)
    t_ids = jnp.arange(T, dtype=jnp.int32)[None, :]   # (1, T)
    mask2d = jnp.zeros((F, T), dtype=jnp.bool_)
    for _ in range(NUM_MASKS):
        key, kf, kt = jax.random.split(key, 3)
        f0, f1 = _sample_mask_bounds(kf, FREQ_MASK_PARAM, F)
        t0, t1 = _sample_mask_bounds(kt, TIME_MASK_PARAM, T)
        mask2d = (mask2d
                  | ((f_ids >= f0) & (f_ids < f1))     # frequency band
                  | ((t_ids >= t0) & (t_ids < t1)))    # time band
    mask_row = mask2d.reshape(1, FT).astype(jnp.int32)

    # ---- tiling ----
    max_block_bytes, vmem_limit, want_two_steps = _chip_settings()
    row_tile = _choose_row_tile(BC, FT * itemsize, itemsize,
                                max_block_bytes, want_two_steps)
    grid_rows = pl.cdiv(BC, row_tile)
    # If a single row step can't feed both v7x TensorCores, split the
    # lane-dense F*T axis into two multiple-of-128 chunks.
    col_tile = FT
    if want_two_steps and grid_rows == 1 and FT % 256 == 0:
        col_tile = FT // 2
    grid_cols = FT // col_tile

    x2d = x.reshape(BC, FT)   # lane-dense view: last dim is F*T

    out = pl.pallas_call(
        _specaugment_kernel,
        out_shape=jax.ShapeDtypeStruct((BC, FT), x.dtype),
        grid_spec=pltpu.PrefetchScalarGridSpec(
            num_scalar_prefetch=0,
            grid=(grid_rows, grid_cols),
            in_specs=[
                # Tiny mask row: constant block index along the row axis, so it
                # stays resident across row steps.
                pl.BlockSpec((1, col_tile), lambda i, j: (0, j)),
                pl.BlockSpec((row_tile, col_tile), lambda i, j: (i, j)),
            ],
            out_specs=pl.BlockSpec((row_tile, col_tile), lambda i, j: (i, j)),
        ),
        compiler_params=pltpu.CompilerParams(
            dimension_semantics=("parallel", "parallel"),
            vmem_limit_bytes=vmem_limit),
        cost_estimate=pl.CostEstimate(
            flops=0,
            transcendentals=0,
            bytes_accessed=2 * BC * FT * itemsize + FT * 4),
    )(mask_row, x2d)

    # TODO(synk): a donated (input_output_aliases) band-only write variant
    # (zero only the <=15 freq rows and <=35-wide time strips, skip reading x)
    # would cut HBM traffic ~10-50x but changes the donation-free semantics.
    return out.reshape(B, C, F, T)


if __name__ == "__main__":
    root = jax.random.PRNGKey(0)
    kx, kmask = jax.random.split(root)
    # Small spectrogram batch: (batch=2, channels=4, freq=16, time=16).
    x = jax.random.normal(kx, (2, 4, 16, 16), dtype=jnp.float32)
    y = spec_augment(x, kmask)
    jax.block_until_ready(y)

    assert y.shape == x.shape and y.dtype == x.dtype
    # Every element is either passed through unchanged or zeroed by a band.
    assert bool(jnp.all((y == x) | (y == 0.0)))
    # The zeroed positions must be identical for every (batch, channel) slice
    # (shared mask, iid_masks=False).
    zeroed = (y == 0.0) & (x != 0.0)
    assert bool(jnp.all(zeroed == zeroed[0, 0][None, None]))
    print("KERNEL_OK")
</pallas_src>

<mosaic_0001>
module attributes {stable_mosaic.version = 11 : i64} {
  func.func @_specaugment_kernel(%arg0: i32, %arg1: i32, %arg2: memref<1x256xi32, #tpu.memory_space<vmem>>, %arg3: memref<8x256xf32, #tpu.memory_space<vmem>>, %arg4: memref<8x256xf32, #tpu.memory_space<vmem>>) attributes {dimension_semantics = [#tpu.dimension_semantics<parallel>, #tpu.dimension_semantics<parallel>], iteration_bounds = array<i64: 1, 1>, scalar_prefetch = 0 : i64, scratch_operands = 0 : i64, tpu.core_type = #tpu.core_type<tc>, window_params = [{transform_indices = @transform_0, window_bounds = array<i64: 1, 256>}, {transform_indices = @transform_1, window_bounds = array<i64: 8, 256>}, {transform_indices = @transform_2, window_bounds = array<i64: 8, 256>}]} {
    %c0 = arith.constant 0 : index
    %c0_0 = arith.constant 0 : index
    %0 = vector.load %arg2[%c0, %c0_0] : memref<1x256xi32, #tpu.memory_space<vmem>>, vector<1x256xi32>
    %c0_i32 = arith.constant 0 : i32
    %1 = vector.broadcast %c0_i32 : i32 to vector<1x256xi32>
    %2 = arith.cmpi ne, %0, %1 : vector<1x256xi32>
    %c0_1 = arith.constant 0 : index
    %c0_2 = arith.constant 0 : index
    %3 = vector.load %arg3[%c0_1, %c0_2] : memref<8x256xf32, #tpu.memory_space<vmem>>, vector<8x256xf32>
    %cst = arith.constant 0.000000e+00 : f32
    %4 = vector.shape_cast %2 : vector<1x256xi1> to vector<1x256xi1>
    %5 = vector.broadcast %4 : vector<1x256xi1> to vector<8x256xi1>
    %6 = vector.broadcast %cst : f32 to vector<8x256xf32>
    %7 = arith.select %5, %6, %3 : vector<8x256xi1>, vector<8x256xf32>
    %c0_3 = arith.constant 0 : index
    %c0_4 = arith.constant 0 : index
    %8 = vector.load %arg4[%c0_3, %c0_4] : memref<8x256xf32, #tpu.memory_space<vmem>>, vector<8x256xf32>
    tpu.vector_store %arg4[%c0_3, %c0_4], %7 {strides = array<i32>} : memref<8x256xf32, #tpu.memory_space<vmem>>, vector<8x256xf32>,
    return
  }
  func.func @transform_0(%arg0: i32, %arg1: i32) -> (i32, i32) {
    %c0_i32 = arith.constant 0 : i32
    %c0_i32_0 = arith.constant 0 : i32
    return %c0_i32, %arg1 : i32, i32
  }
  func.func @transform_1(%arg0: i32, %arg1: i32) -> (i32, i32) {
    %c0_i32 = arith.constant 0 : i32
    return %arg0, %arg1 : i32, i32
  }
  func.func @transform_2(%arg0: i32, %arg1: i32) -> (i32, i32) {
    %c0_i32 = arith.constant 0 : i32
    return %arg0, %arg1 : i32, i32
  }
}

</mosaic_0001>

<llo_original>
// kernel: tpu_custom_call.1
$region0: #{tpu_custom_call.1}
  #allocation0 [shape = 'u32[]', space=smem, size = 0x4, offset = 0x4, fixed_abs, tag = 'smem constant byte address 0x4 - core index']
  #allocation1 [shape = 'u32[144,128]{1,0:T(1,128)}', space=vmem, size = 0x12000, scoped, tag = 'internal scratch']
  %s0 = inlined_call_operand.hbm [shape: s32[1,256], index: 0, kind: input, shape index: {}]
  %s1 = inlined_call_operand.hbm [shape: f32[8,256], index: 1, kind: input, shape index: {}]
  %s2 = inlined_call_operand.hbm [shape: f32[8,256], index: 2, kind: output, shape index: {}]
  %s3 = sld [smem:[#allocation0]]
  $region26: #{tpu_custom_call.1} parent=0
    _
  %s5 = ssub.s32 1, %s3
  %s6 = scalar_select 0, %s5, %s3
  $region1: #{tpu_custom_call.1} parent=0
    #allocation2 [shape = 'u8[1024]{0}', space=vmem, size = 0x400, scoped, tag = 'input window, operand 0, single buffered']
    #allocation3 [shape = 's32[1]{0}', space=sflag, size = 0x4, scoped, tag = 'scoped memory for tpu_custom_call.1']
    #allocation4 [shape = 's32[1]{0}', space=sflag, size = 0x4, scoped, tag = 'scoped memory for tpu_custom_call.1']
    #allocation5 [shape = 'u8[8192]{0}', space=vmem, size = 0x2000, scoped, tag = 'input window, operand 1, single buffered']
    #allocation6 [shape = 's32[1]{0}', space=sflag, size = 0x4, scoped, tag = 'scoped memory for tpu_custom_call.1']
    #allocation7 [shape = 'u8[8192]{0}', space=vmem, size = 0x2000, scoped, tag = 'output window, operand 0, single buffered']
    %7 = vsyncpa [#allocation3], 0
    %8 = vsyncpa [#allocation6], 0
    %9 = vsyncpa [#allocation4], 0
    // Predicated region
    $region2: #{tpu_custom_call.1} parent=1 // pred_check
      _
    $region3: #{tpu_custom_call.1} parent=1 // pred_check_branch
      %11 = sbr.rel (0) target = $region5
    $region4: #{tpu_custom_call.1} parent=1 // pred_region
      %s13 = ssub.s32 32, 32
      %14 = vsyncadd [#allocation3], %s13
      %s16 = sshll.u32 [#allocation2], 4
      %s17 = int_to_ptr.vmem [resolvable:$true] %s16
      %19 = dma.hbm_to_vmem [thread:$0]  %s0, 32, %s17, [#allocation3]
    $region5: #{tpu_custom_call.1} parent=1 // pred_fallthru
      _
    // Predicated region
    $region6: #{tpu_custom_call.1} parent=1 // pred_check
      _
    $region7: #{tpu_custom_call.1} parent=1 // pred_check_branch
      %21 = sbr.rel (0) target = $region9
    $region8: #{tpu_custom_call.1} parent=1 // pred_region
      %s23 = ssub.s32 256, 256
      %24 = vsyncadd [#allocation6], %s23
      %s26 = sshll.u32 [#allocation5], 4
      %s27 = int_to_ptr.vmem [resolvable:$true] %s26
      %29 = dma.hbm_to_vmem [thread:$0]  %s1, 256, %s27, [#allocation6]
    $region9: #{tpu_custom_call.1} parent=1 // pred_fallthru
      _
    // Predicated region
    $region10: #{tpu_custom_call.1} parent=1 // pred_check
      _
    $region11: #{tpu_custom_call.1} parent=1 // pred_check_branch
      %31 = sbr.rel (0) target = $region13
    $region12: #{tpu_custom_call.1} parent=1 // pred_region
      %32 = dma.done [#allocation3], 32
    $region13: #{tpu_custom_call.1} parent=1 // pred_fallthru
      _
    // Predicated region
    $region14: #{tpu_custom_call.1} parent=1 // pred_check
      _
    $region15: #{tpu_custom_call.1} parent=1 // pred_check_branch
      %34 = sbr.rel (0) target = $region17
    $region16: #{tpu_custom_call.1} parent=1 // pred_region
      %35 = dma.done [#allocation6], 256
    $region17: #{tpu_custom_call.1} parent=1 // pred_fallthru
      _
    %v36 = vld [vmem:[#allocation2] sm:$0x3]
    %vm37 = vcmp.ne.s32.totalorder %v36, 0
    %v38 = vld [vmem:[#allocation5] sm:$0xff]
    %v39 = vld [vmem:[#allocation5 + $0x8] sm:$0xff]
    %v40 = vsel %vm37, 1, 0
    %v41 = vlaneseq
    %v42 = vshrl.u32 %v41, 7
    %v43 = vsub.s32 0, %v42
    %v44 = vrot.slane %v40, %v43
    %v45 = vlaneseq
    %v46 = vshrl.u32 %v45, 7
    %v47 = vsub.s32 1, %v46
    %v48 = vrot.slane %v40, %v47
    %vm49 = vcmp.eq.s32.totalorder %v44, 1
    %vm50 = vcmp.eq.s32.totalorder %v48, 1
    %v51 = vsel %vm49, 0.0, %v38
    %v52 = vsel %vm50, 0.0, %v39
    %53 = vst [vmem:[#allocation7] sm:$0xff] %v51
    %54 = vst [vmem:[#allocation7 + $0x8] sm:$0xff] %v52
    // Predicated region
    $region18: #{tpu_custom_call.1} parent=1 // pred_check
      _
    $region19: #{tpu_custom_call.1} parent=1 // pred_check_branch
      %56 = sbr.rel (0) target = $region21
    $region20: #{tpu_custom_call.1} parent=1 // pred_region
      %s58 = ssub.s32 256, 256
      %59 = vsyncadd [#allocation4], %s58
      %s61 = sshll.u32 [#allocation7], 4
      %s62 = int_to_ptr.vmem [resolvable:$true] %s61
      %64 = dma.vmem_to_hbm [thread:$0]  %s62, 256, %s2, [#allocation4]
    $region21: #{tpu_custom_call.1} parent=1 // pred_fallthru
      _
    // Predicated region
    $region22: #{tpu_custom_call.1} parent=1 // pred_check
      _
    $region23: #{tpu_custom_call.1} parent=1 // pred_check_branch
      %66 = sbr.rel (0) target = $region25
    $region24: #{tpu_custom_call.1} parent=1 // pred_region
      %67 = dma.done [#allocation4], 256
    $region25: #{tpu_custom_call.1} parent=1 // pred_fallthru
      _
    %68 = vsyncpa [#allocation3], 1
    %69 = vsyncpa [#allocation6], 1
    %70 = vsyncpa [#allocation4], 1

</llo_original>
